<compile_context>
chip_gen: v7x
topology: tpu7x:2x2x1
jax: 0.10.0
libtpu: 0.0.40
codegen_flags: <defaults>
</compile_context>

<pallas_src>
import functools

import jax
import jax.numpy as jnp
from jax.experimental import pallas as pl
from jax.experimental.pallas import tpu as pltpu

_LANES = 128
_SUBLANES = 8
_GROUP = _SUBLANES * _LANES  # 1024 elements = one full (8,128) f32 vreg tile


def _dice_kernel(pred_ref, targ_ref, loss_ref, num_acc, den_acc, *, smooth, p):
    """Grid = (batch_blocks, feature_blocks); the feature axis (last) reduces."""
    k = pl.program_id(1)

    @pl.when(k == 0)
    def _init():
        num_acc[...] = jnp.zeros_like(num_acc)
        den_acc[...] = jnp.zeros_like(den_acc)

    x = pred_ref[...].astype(jnp.float32)   # (bn, gc, 8, 128)
    y = targ_ref[...].astype(jnp.float32)

    prod = x * y
    if p == 2.0:
        den_t = x * x + y * y               # single mul+add, stays on the VPU
    elif p == 1.0:
        den_t = x + y
    elif float(p).is_integer():
        ip = int(p)
        den_t = x ** ip + y ** ip           # lax.integer_pow (repeated multiply)
    else:
        den_t = jnp.power(x, p) + jnp.power(y, p)

    # Reduce over the group axis only: pure elementwise vreg adds (no XLU).
    num_acc[...] += jnp.sum(prod, axis=1)   # (bn, 8, 128)
    den_acc[...] += jnp.sum(den_t, axis=1)

    @pl.when(k == pl.num_programs(1) - 1)
    def _finalize():
        # Cross-lane / cross-sublane reduction once per kernel, not per step.
        num = jnp.sum(num_acc[...], axis=2).sum(axis=1, keepdims=True) + smooth
        den = jnp.sum(den_acc[...], axis=2).sum(axis=1, keepdims=True) + smooth
        loss_ref[...] = 1.0 - num / den     # (bn, 1)


def _round_up(x, m):
    return ((x + m - 1) // m) * m


def _pick_batch_block(n):
    """Rows per batch block: a divisor of n, <= 64, preferring multiples of 8
    so several blocks exist for the 'parallel' (megacore) grid axis."""
    if n < 16:
        return n
    for bn in (64, 56, 48, 40, 32, 24, 16, 8):
        if n % bn == 0:
            return bn
    for bn in range(min(n, 64), 0, -1):
        if n % bn == 0:
            return bn
    return n


def _reference(predict, target, smooth, p, reduction):
    n = predict.shape[0]
    pr = predict.reshape(n, -1).astype(jnp.float32)
    tg = target.reshape(n, -1).astype(jnp.float32)
    num = jnp.sum(pr * tg, axis=1) + smooth
    den = jnp.sum(pr ** p + tg ** p, axis=1) + smooth
    loss = 1.0 - num / den
    if reduction == "mean":
        return jnp.mean(loss)
    elif reduction == "sum":
        return jnp.sum(loss)
    elif reduction == "none":
        return loss
    else:
        raise Exception("Unexpected reduction {}".format(reduction))


def binary_dice_loss(predict, target, *, smooth=1.0, p=2, reduction="mean",
                     target_block_bytes=4 << 20, use_pallas=None):
    """Pallas implementation of BinaryDiceLoss.forward.

    predict, target: same shape [N, *] (e.g. NCHW). Returns a scalar for
    'mean'/'sum', or a [N] tensor for 'none'.
    """
    assert predict.shape[0] == target.shape[0], \
        "predict & target batch size don't match"

    smooth = float(smooth)
    p = float(p)  # keep non-integer p (PyTorch allows it); no int() truncation
    n = predict.shape[0]
    pred2d = predict.reshape(n, -1)
    targ2d = target.reshape(n, -1)
    d = pred2d.shape[1]
    itemsize = max(jnp.dtype(pred2d.dtype).itemsize,
                   jnp.dtype(targ2d.dtype).itemsize)

    total_bytes = (pred2d.size + targ2d.size) * itemsize
    if use_pallas is None:
        # Tiny problems: pallas_call launch + per-step overhead dominates;
        # let XLA fuse the whole thing instead.
        use_pallas = total_bytes >= (2 << 20)
    # Zero-padding of the feature axis is only exact for p > 0.
    if (not use_pallas) or p <= 0.0:
        return _reference(predict, target, smooth, p, reduction)

    bn = _pick_batch_block(n)

    # Pack the feature axis into full (8, 128) tiles: [N, G, 8, 128].
    g = pl.cdiv(d, _GROUP)
    # Feature groups per block, sized for ~target_block_bytes per input block.
    gc = max(1, int(target_block_bytes) // (bn * _GROUP * itemsize))
    gc = min(gc, g)
    g_padded = _round_up(g, gc)
    d_padded = g_padded * _GROUP
    if d_padded != d:
        pad = d_padded - d
        pred2d = jnp.pad(pred2d, ((0, 0), (0, pad)))
        targ2d = jnp.pad(targ2d, ((0, 0), (0, pad)))
    pred4d = pred2d.reshape(n, g_padded, _SUBLANES, _LANES)
    targ4d = targ2d.reshape(n, g_padded, _SUBLANES, _LANES)

    block_bytes = bn * gc * _GROUP * itemsize
    # 2 inputs x 2 pipeline buffers + elementwise temporaries, with headroom;
    # stay well under v7x's 64 MiB physical VMEM (covers v5e's 16 MiB default).
    vmem_limit = int(min(48 << 20, max(32 << 20, 8 * block_bytes + (4 << 20))))

    grid = (n // bn, g_padded // gc)
    kernel = functools.partial(_dice_kernel, smooth=smooth, p=p)

    per_sample = pl.pallas_call(
        kernel,
        out_shape=jax.ShapeDtypeStruct((n, 1), jnp.float32),
        grid_spec=pltpu.PrefetchScalarGridSpec(
            num_scalar_prefetch=0,
            grid=grid,
            in_specs=[
                pl.BlockSpec((bn, gc, _SUBLANES, _LANES),
                             lambda b, k: (b, k, 0, 0)),
                pl.BlockSpec((bn, gc, _SUBLANES, _LANES),
                             lambda b, k: (b, k, 0, 0)),
            ],
            out_specs=pl.BlockSpec((bn, 1), lambda b, k: (b, 0)),
            scratch_shapes=[
                pltpu.VMEM((bn, _SUBLANES, _LANES), jnp.float32),  # num acc
                pltpu.VMEM((bn, _SUBLANES, _LANES), jnp.float32),  # den acc
            ],
        ),
        compiler_params=pltpu.CompilerParams(
            dimension_semantics=("parallel", "arbitrary"),
            vmem_limit_bytes=vmem_limit,
        ),
    )(pred4d, targ4d)

    loss = per_sample[:, 0]  # [N]

    if reduction == "mean":
        return jnp.mean(loss)
    elif reduction == "sum":
        return jnp.sum(loss)
    elif reduction == "none":
        return loss
    else:
        raise Exception("Unexpected reduction {}".format(reduction))


if __name__ == "__main__":
    key = jax.random.PRNGKey(0)
    k1, k2 = jax.random.split(key)

    # Small NCHW shapes: batch=2, channels=4, spatial=16x16 -> D = 1024.
    shape = (2, 4, 16, 16)
    predict = jax.nn.sigmoid(jax.random.normal(k1, shape, dtype=jnp.float32))
    target = (jax.random.uniform(k2, shape) > 0.5).astype(jnp.float32)

    # Force the Pallas path (the auto heuristic would route tiny inputs to XLA).
    out_mean = binary_dice_loss(predict, target, smooth=1.0, p=2,
                                reduction="mean", use_pallas=True)
    out_mean = jax.block_until_ready(out_mean)
    ref_mean = _reference(predict, target, 1.0, 2.0, "mean")
    assert jnp.allclose(out_mean, ref_mean, atol=1e-5, rtol=1e-5), \
        (out_mean, ref_mean)

    out_none = binary_dice_loss(predict, target, smooth=1.0, p=2,
                                reduction="none", use_pallas=True)
    out_none = jax.block_until_ready(out_none)
    ref_none = _reference(predict, target, 1.0, 2.0, "none")
    assert jnp.allclose(out_none, ref_none, atol=1e-5, rtol=1e-5), \
        (out_none, ref_none)

    print("KERNEL_OK")
</pallas_src>

<mosaic_0001>
module attributes {stable_mosaic.version = 11 : i64} {
  func.func @_dice_kernel(%arg0: i32, %arg1: i32, %arg2: memref<2x1x8x128xf32, #tpu.memory_space<vmem>>, %arg3: memref<2x1x8x128xf32, #tpu.memory_space<vmem>>, %arg4: memref<2x1xf32, #tpu.memory_space<vmem>>, %arg5: memref<2x8x128xf32, #tpu.memory_space<vmem>>, %arg6: memref<2x8x128xf32, #tpu.memory_space<vmem>>) attributes {dimension_semantics = [#tpu.dimension_semantics<parallel>, #tpu.dimension_semantics<arbitrary>], iteration_bounds = array<i64: 1, 1>, scalar_prefetch = 0 : i64, scratch_operands = 2 : i64, tpu.core_type = #tpu.core_type<tc>, window_params = [{transform_indices = @transform_0, window_bounds = array<i64: 2, 1, 8, 128>}, {transform_indices = @transform_1, window_bounds = array<i64: 2, 1, 8, 128>}, {transform_indices = @transform_2, window_bounds = array<i64: 2, 1>}]} {
    %c0_i32 = arith.constant 0 : i32
    %0 = arith.cmpi eq, %arg1, %c0_i32 : i32
    %1 = arith.extui %0 : i1 to i32
    %c0_i32_0 = arith.constant 0 : i32
    %2 = arith.cmpi ne, %1, %c0_i32_0 : i32
    scf.if %2 {
      %cst_23 = arith.constant 0.000000e+00 : f32
      %20 = vector.broadcast %cst_23 : f32 to vector<2x8x128xf32>
      %c0_24 = arith.constant 0 : index
      %c0_25 = arith.constant 0 : index
      %c0_26 = arith.constant 0 : index
      %21 = vector.load %arg5[%c0_24, %c0_25, %c0_26] : memref<2x8x128xf32, #tpu.memory_space<vmem>>, vector<2x8x128xf32>
      tpu.vector_store %arg5[%c0_24, %c0_25, %c0_26], %20 {strides = array<i32>} : memref<2x8x128xf32, #tpu.memory_space<vmem>>, vector<2x8x128xf32>,
      %cst_27 = arith.constant 0.000000e+00 : f32
      %22 = vector.broadcast %cst_27 : f32 to vector<2x8x128xf32>
      %c0_28 = arith.constant 0 : index
      %c0_29 = arith.constant 0 : index
      %c0_30 = arith.constant 0 : index
      %23 = vector.load %arg6[%c0_28, %c0_29, %c0_30] : memref<2x8x128xf32, #tpu.memory_space<vmem>>, vector<2x8x128xf32>
      tpu.vector_store %arg6[%c0_28, %c0_29, %c0_30], %22 {strides = array<i32>} : memref<2x8x128xf32, #tpu.memory_space<vmem>>, vector<2x8x128xf32>,
    } else {
    }
    %c0 = arith.constant 0 : index
    %c0_1 = arith.constant 0 : index
    %c0_2 = arith.constant 0 : index
    %c0_3 = arith.constant 0 : index
    %3 = vector.load %arg2[%c0, %c0_1, %c0_2, %c0_3] : memref<2x1x8x128xf32, #tpu.memory_space<vmem>>, vector<2x1x8x128xf32>
    %c0_4 = arith.constant 0 : index
    %c0_5 = arith.constant 0 : index
    %c0_6 = arith.constant 0 : index
    %c0_7 = arith.constant 0 : index
    %4 = vector.load %arg3[%c0_4, %c0_5, %c0_6, %c0_7] : memref<2x1x8x128xf32, #tpu.memory_space<vmem>>, vector<2x1x8x128xf32>
    %5 = arith.mulf %3, %4 : vector<2x1x8x128xf32>
    %6 = arith.mulf %3, %3 : vector<2x1x8x128xf32>
    %7 = arith.mulf %4, %4 : vector<2x1x8x128xf32>
    %8 = arith.addf %6, %7 : vector<2x1x8x128xf32>
    %c0_8 = arith.constant 0 : index
    %c0_9 = arith.constant 0 : index
    %c0_10 = arith.constant 0 : index
    %9 = vector.load %arg5[%c0_8, %c0_9, %c0_10] : memref<2x8x128xf32, #tpu.memory_space<vmem>>, vector<2x8x128xf32>
    %cst = arith.constant dense<0.000000e+00> : vector<2x8x128xf32>
    %10 = vector.multi_reduction <add>, %5, %cst [1] : vector<2x1x8x128xf32> to vector<2x8x128xf32>
    %11 = arith.addf %9, %10 : vector<2x8x128xf32>
    %c0_11 = arith.constant 0 : index
    %c0_12 = arith.constant 0 : index
    %c0_13 = arith.constant 0 : index
    %12 = vector.load %arg5[%c0_11, %c0_12, %c0_13] : memref<2x8x128xf32, #tpu.memory_space<vmem>>, vector<2x8x128xf32>
    tpu.vector_store %arg5[%c0_11, %c0_12, %c0_13], %11 {strides = array<i32>} : memref<2x8x128xf32, #tpu.memory_space<vmem>>, vector<2x8x128xf32>,
    %c0_14 = arith.constant 0 : index
    %c0_15 = arith.constant 0 : index
    %c0_16 = arith.constant 0 : index
    %13 = vector.load %arg6[%c0_14, %c0_15, %c0_16] : memref<2x8x128xf32, #tpu.memory_space<vmem>>, vector<2x8x128xf32>
    %cst_17 = arith.constant dense<0.000000e+00> : vector<2x8x128xf32>
    %14 = vector.multi_reduction <add>, %8, %cst_17 [1] : vector<2x1x8x128xf32> to vector<2x8x128xf32>
    %15 = arith.addf %13, %14 : vector<2x8x128xf32>
    %c0_18 = arith.constant 0 : index
    %c0_19 = arith.constant 0 : index
    %c0_20 = arith.constant 0 : index
    %16 = vector.load %arg6[%c0_18, %c0_19, %c0_20] : memref<2x8x128xf32, #tpu.memory_space<vmem>>, vector<2x8x128xf32>
    tpu.vector_store %arg6[%c0_18, %c0_19, %c0_20], %15 {strides = array<i32>} : memref<2x8x128xf32, #tpu.memory_space<vmem>>, vector<2x8x128xf32>,
    %c0_i32_21 = arith.constant 0 : i32
    %17 = arith.cmpi eq, %arg1, %c0_i32_21 : i32
    %18 = arith.extui %17 : i1 to i32
    %c0_i32_22 = arith.constant 0 : i32
    %19 = arith.cmpi ne, %18, %c0_i32_22 : i32
    scf.if %19 {
      %c0_23 = arith.constant 0 : index
      %c0_24 = arith.constant 0 : index
      %c0_25 = arith.constant 0 : index
      %20 = vector.load %arg5[%c0_23, %c0_24, %c0_25] : memref<2x8x128xf32, #tpu.memory_space<vmem>>, vector<2x8x128xf32>
      %cst_26 = arith.constant dense<0.000000e+00> : vector<2x8xf32>
      %21 = vector.multi_reduction <add>, %20, %cst_26 [2] : vector<2x8x128xf32> to vector<2x8xf32>
      %cst_27 = arith.constant dense<0.000000e+00> : vector<2xf32>
      %22 = vector.multi_reduction <add>, %21, %cst_27 [1] : vector<2x8xf32> to vector<2xf32>
      %23 = vector.shape_cast %22 : vector<2xf32> to vector<2x1xf32>
      %cst_28 = arith.constant 1.000000e+00 : f32
      %24 = vector.broadcast %cst_28 : f32 to vector<2x1xf32>
      %25 = arith.addf %23, %24 : vector<2x1xf32>
      %c0_29 = arith.constant 0 : index
      %c0_30 = arith.constant 0 : index
      %c0_31 = arith.constant 0 : index
      %26 = vector.load %arg6[%c0_29, %c0_30, %c0_31] : memref<2x8x128xf32, #tpu.memory_space<vmem>>, vector<2x8x128xf32>
      %cst_32 = arith.constant dense<0.000000e+00> : vector<2x8xf32>
      %27 = vector.multi_reduction <add>, %26, %cst_32 [2] : vector<2x8x128xf32> to vector<2x8xf32>
      %cst_33 = arith.constant dense<0.000000e+00> : vector<2xf32>
      %28 = vector.multi_reduction <add>, %27, %cst_33 [1] : vector<2x8xf32> to vector<2xf32>
      %29 = vector.shape_cast %28 : vector<2xf32> to vector<2x1xf32>
      %cst_34 = arith.constant 1.000000e+00 : f32
      %30 = vector.broadcast %cst_34 : f32 to vector<2x1xf32>
      %31 = arith.addf %29, %30 : vector<2x1xf32>
      %32 = arith.divf %25, %31 : vector<2x1xf32>
      %cst_35 = arith.constant 1.000000e+00 : f32
      %33 = vector.broadcast %cst_35 : f32 to vector<2x1xf32>
      %34 = arith.subf %33, %32 : vector<2x1xf32>
      %c0_36 = arith.constant 0 : index
      %c0_37 = arith.constant 0 : index
      %35 = vector.load %arg4[%c0_36, %c0_37] : memref<2x1xf32, #tpu.memory_space<vmem>>, vector<2x1xf32>
      tpu.vector_store %arg4[%c0_36, %c0_37], %34 {strides = array<i32>} : memref<2x1xf32, #tpu.memory_space<vmem>>, vector<2x1xf32>,
    } else {
    }
    return
  }
  func.func @transform_0(%arg0: i32, %arg1: i32) -> (i32, i32, i32, i32) {
    %c0_i32 = arith.constant 0 : i32
    %c0_i32_0 = arith.constant 0 : i32
    %c0_i32_1 = arith.constant 0 : i32
    return %arg0, %arg1, %c0_i32, %c0_i32_0 : i32, i32, i32, i32
  }
  func.func @transform_1(%arg0: i32, %arg1: i32) -> (i32, i32, i32, i32) {
    %c0_i32 = arith.constant 0 : i32
    %c0_i32_0 = arith.constant 0 : i32
    %c0_i32_1 = arith.constant 0 : i32
    return %arg0, %arg1, %c0_i32, %c0_i32_0 : i32, i32, i32, i32
  }
  func.func @transform_2(%arg0: i32, %arg1: i32) -> (i32, i32) {
    %c0_i32 = arith.constant 0 : i32
    %c0_i32_0 = arith.constant 0 : i32
    return %arg0, %c0_i32 : i32, i32
  }
}

</mosaic_0001>

<llo_original>
// kernel: tpu_custom_call.1
$region0: #{tpu_custom_call.1}
  #allocation0 [shape = 'u32[]', space=smem, size = 0x4, offset = 0x4, fixed_abs, tag = 'smem constant byte address 0x4 - core index']
  #allocation1 [shape = 'u32[144,128]{1,0:T(1,128)}', space=vmem, size = 0x12000, scoped, tag = 'internal scratch']
  #allocation2 [shape = 'f32[2,8,128]{2,1,0:T(8,128)}', space=vmem, size = 0x2000, scoped, tag = 'scratch operand']
  #allocation3 [shape = 'f32[2,8,128]{2,1,0:T(8,128)}', space=vmem, size = 0x2000, scoped, tag = 'scratch operand']
  %s0 = inlined_call_operand.hbm [shape: f32[2,1,8,128], index: 0, kind: input, shape index: {}]
  %s1 = inlined_call_operand.hbm [shape: f32[2,1,8,128], index: 1, kind: input, shape index: {}]
  %s2 = inlined_call_operand.vmem [shape: f32[2,1], index: 2, kind: output, shape index: {}]
  %s3 = sld [smem:[#allocation0]]
  $region34: #{tpu_custom_call.1} parent=0
    _
  %s5 = ssub.s32 1, %s3
  %s6 = scalar_select 0, %s5, %s3
  $region1: #{tpu_custom_call.1} parent=0
    #allocation4 [shape = 'u8[8192]{0}', space=vmem, size = 0x2000, scoped, tag = 'input window, operand 0, single buffered']
    #allocation5 [shape = 's32[1]{0}', space=sflag, size = 0x4, scoped, tag = 'scoped memory for tpu_custom_call.1']
    #allocation6 [shape = 'u8[8192]{0}', space=vmem, size = 0x2000, scoped, tag = 'input window, operand 1, single buffered']
    #allocation7 [shape = 's32[1]{0}', space=sflag, size = 0x4, scoped, tag = 'scoped memory for tpu_custom_call.1']
    %7 = vsyncpa [#allocation5], 0
    %8 = vsyncpa [#allocation7], 0
    // Predicated region
    $region2: #{tpu_custom_call.1} parent=1 // pred_check
      _
    $region3: #{tpu_custom_call.1} parent=1 // pred_check_branch
      %10 = sbr.rel (0) target = $region5
    $region4: #{tpu_custom_call.1} parent=1 // pred_region
      %s12 = ssub.s32 256, 256
      %13 = vsyncadd [#allocation5], %s12
      %s14 = sshll.u32 [#allocation4], 4
      %s15 = int_to_ptr.vmem [resolvable:$true] %s14
      %20 = dma.hbm_to_vmem [thread:$0]  %s0, 256, %s15, [#allocation5], 128, 128, 8
    $region5: #{tpu_custom_call.1} parent=1 // pred_fallthru
      _
    // Predicated region
    $region6: #{tpu_custom_call.1} parent=1 // pred_check
      _
    $region7: #{tpu_custom_call.1} parent=1 // pred_check_branch
      %22 = sbr.rel (0) target = $region9
    $region8: #{tpu_custom_call.1} parent=1 // pred_region
      %s24 = ssub.s32 256, 256
      %25 = vsyncadd [#allocation7], %s24
      %s26 = sshll.u32 [#allocation6], 4
      %s27 = int_to_ptr.vmem [resolvable:$true] %s26
      %32 = dma.hbm_to_vmem [thread:$0]  %s1, 256, %s27, [#allocation7], 128, 128, 8
    $region9: #{tpu_custom_call.1} parent=1 // pred_fallthru
      _
    // Predicated region
    $region10: #{tpu_custom_call.1} parent=1 // pred_check
      _
    $region11: #{tpu_custom_call.1} parent=1 // pred_check_branch
      %34 = sbr.rel (0) target = $region13
    $region12: #{tpu_custom_call.1} parent=1 // pred_region
      %35 = dma.done [#allocation5], 256
    $region13: #{tpu_custom_call.1} parent=1 // pred_fallthru
      _
    // Predicated region
    $region14: #{tpu_custom_call.1} parent=1 // pred_check
      _
    $region15: #{tpu_custom_call.1} parent=1 // pred_check_branch
      %37 = sbr.rel (0) target = $region17
    $region16: #{tpu_custom_call.1} parent=1 // pred_region
      %38 = dma.done [#allocation7], 256
    $region17: #{tpu_custom_call.1} parent=1 // pred_fallthru
      _
    %p39 = scmp.eq.s32.totalorder 0, 0
    // Predicated region
    $region18: #{tpu_custom_call.1} parent=1 // pred_check
      %p40 = pneg %p39
    $region19: #{tpu_custom_call.1} parent=1 // pred_check_branch
      %42 = sbr.rel (%p40) target = $region21
    $region20: #{tpu_custom_call.1} parent=1 // pred_region
      %43 = vst [vmem:[#allocation2] sm:$0xff] 0.0
      %44 = vst [vmem:[#allocation2 + $0x8] sm:$0xff] 0.0
      %45 = vst [vmem:[#allocation3] sm:$0xff] 0.0
      %46 = vst [vmem:[#allocation3 + $0x8] sm:$0xff] 0.0
    $region21: #{tpu_custom_call.1} parent=1 // pred_fallthru
      _
    %v47 = vld [vmem:[#allocation4] sm:$0xff]
    %v48 = vld [vmem:[#allocation4 + $0x8] sm:$0xff]
    %v49 = vld [vmem:[#allocation6] sm:$0xff]
    %v50 = vld [vmem:[#allocation6 + $0x8] sm:$0xff]
    %v51 = vmul.f32 %v47, %v49
    %v52 = vmul.f32 %v48, %v50
    %v53 = vmul.f32 %v47, %v47
    %v54 = vmul.f32 %v48, %v48
    %v55 = vmul.f32 %v49, %v49
    %v56 = vmul.f32 %v50, %v50
    %v57 = vadd.f32 %v53, %v55
    %v58 = vadd.f32 %v54, %v56
    %v59 = vld [vmem:[#allocation2] sm:$0xff]
    %v60 = vld [vmem:[#allocation2 + $0x8] sm:$0xff]
    %v61 = vadd.f32 %v51, 0.0
    %v62 = vadd.f32 %v52, 0.0
    %v63 = vadd.f32 %v59, %v61
    %v64 = vadd.f32 %v60, %v62
    %65 = vst [vmem:[#allocation2] sm:$0xff] %v63
    %66 = vst [vmem:[#allocation2 + $0x8] sm:$0xff] %v64
    %v67 = vld [vmem:[#allocation3] sm:$0xff]
    %v68 = vld [vmem:[#allocation3 + $0x8] sm:$0xff]
    %v69 = vadd.f32 %v57, 0.0
    %v70 = vadd.f32 %v58, 0.0
    %v71 = vadd.f32 %v67, %v69
    %v72 = vadd.f32 %v68, %v70
    %73 = vst [vmem:[#allocation3] sm:$0xff] %v71
    %74 = vst [vmem:[#allocation3 + $0x8] sm:$0xff] %v72
    // Predicated region
    $region22: #{tpu_custom_call.1} parent=1 // pred_check
      %p75 = pneg %p39
    $region23: #{tpu_custom_call.1} parent=1 // pred_check_branch
      %77 = sbr.rel (%p75) target = $region25
    $region24: #{tpu_custom_call.1} parent=1 // pred_region
      %v78 = vld [vmem:[#allocation2] sm:$0xff]
      %v79 = vld [vmem:[#allocation2 + $0x8] sm:$0xff]
      %80 = vadd.xlane.f32.xlu0 %v78
      %v81 = vpop.xlane.xlu0 %80
      %82 = vadd.xlane.f32.xlu0 %v79
      %v83 = vpop.xlane.xlu0 %82
      %v86 = vlaneseq
      %v87 = vand.u32 %v86, 127
      %v88 = vlaneseq
      %v89 = vshrl.u32 %v88, 7
      %v90 = vsub.s32 %v87, %v89
      %v91 = vrot.slane %v81, %v90
      %v92 = vlaneseq
      %v93 = vshrl.u32 %v92, 7
      %v94 = vsub.s32 %v87, %v93
      %v95 = vrot.slane %v83, %v94
      %vm96 = vcmask 1041409
      %v97 = vsel %vm96, %v95, %v91
      %vm99 = vcmask 58368
      %v100 = vsel %vm99, %v97, 0.0
      %101 = vadd.xlane.f32.xlu0 %v100
      %v102 = vpop.xlane.xlu0 %101
      %v103 = vadd.f32 %v102, 1.0
      %v104 = vld [vmem:[#allocation3] sm:$0xff]
      %v105 = vld [vmem:[#allocation3 + $0x8] sm:$0xff]
      %106 = vadd.xlane.f32.xlu0 %v104
      %v107 = vpop.xlane.xlu0 %106
      %108 = vadd.xlane.f32.xlu0 %v105
      %v109 = vpop.xlane.xlu0 %108
      %v112 = vlaneseq
      %v113 = vshrl.u32 %v112, 7
      %v114 = vsub.s32 %v87, %v113
      %v115 = vrot.slane %v107, %v114
      %v116 = vlaneseq
      %v117 = vshrl.u32 %v116, 7
      %v118 = vsub.s32 %v87, %v117
      %v119 = vrot.slane %v109, %v118
      %v120 = vsel %vm96, %v119, %v115
      %v122 = vsel %vm99, %v120, 0.0
      %123 = vadd.xlane.f32.xlu0 %v122
      %v124 = vpop.xlane.xlu0 %123
      %v125 = vadd.f32 %v124, 1.0
      %v126 = vrcp.pop %v125
      %v127 = vmul.f32 %v103, %v126
      %v128 = vsub.f32 1.0, %v127
      %vm129 = vcmask 1024
      %130 = vst.msk [vmem:[%s2] sm:$0x3] %vm129, %v128
    $region25: #{tpu_custom_call.1} parent=1 // pred_fallthru
      _
    // Predicated region
    $region26: #{tpu_custom_call.1} parent=1 // pred_check
      _
    $region27: #{tpu_custom_call.1} parent=1 // pred_check_branch
      %132 = sbr.rel (0) target = $region29
    $region28: #{tpu_custom_call.1} parent=1 // pred_region
      _
    $region29: #{tpu_custom_call.1} parent=1 // pred_fallthru
      _
    // Predicated region
    $region30: #{tpu_custom_call.1} parent=1 // pred_check
      _
    $region31: #{tpu_custom_call.1} parent=1 // pred_check_branch
      %134 = sbr.rel (0) target = $region33
    $region32: #{tpu_custom_call.1} parent=1 // pred_region
      _
    $region33: #{tpu_custom_call.1} parent=1 // pred_fallthru
      _
    %135 = vsyncpa [#allocation5], 1
    %136 = vsyncpa [#allocation7], 1

</llo_original>
